<compile_context>
chip_gen: v5e
topology: v5e:2x2
jax: 0.10.0
libtpu: 0.0.40
codegen_flags: <defaults>
</compile_context>

<pallas_src>
import random
from typing import Sequence

import jax
import jax.numpy as jnp
from jax.experimental import pallas as pl
from jax.experimental.pallas import tpu as pltpu


# ----------------------------- Pallas kernels -----------------------------

def _make_gamma_kernel(mode: str, use_gain: bool):
    """Build an elementwise gamma-correction kernel with `mode` baked in.

    mode: "linear" (gamma==1), "square" (gamma==2), "sqrt" (gamma==0.5),
          "pow" (general gamma via exp/log).
    params_ref : SMEM (2,) float32 -> [gamma, gain]
    """

    def kernel(params_ref, x_ref, o_ref):
        x = x_ref[...].astype(jnp.float32)
        if mode == "linear":            # gamma == 1
            y = x
        elif mode == "square":          # gamma == 2: pure VPU
            y = x * x
        elif mode == "sqrt":            # gamma == 0.5: single EUP op
            y = jnp.sqrt(x)
        else:                           # general pow via exp(gamma*log(x)): 2 EUP ops
            gamma = params_ref[0]
            safe_x = jnp.maximum(x, jnp.float32(1e-12))
            y = jnp.exp(gamma * jnp.log(safe_x))
            y = jnp.where(x <= 0.0, jnp.float32(0.0), y)
        if use_gain:
            y = y * params_ref[1]
        # Float images are clamped to [0, 1] (torchvision adjust_gamma semantics).
        if mode == "linear" or use_gain:
            y = jnp.clip(y, 0.0, 1.0)
        else:
            # y >= 0 already (pow path zeroes x<=0; square/sqrt of [0,1] input).
            y = jnp.minimum(y, jnp.float32(1.0))
        o_ref[...] = y.astype(o_ref.dtype)

    return kernel


# ------------------------------- Wrapper -----------------------------------

_SMALL_BYTES = 2 * 1024 * 1024          # arrays at/below this can run as one block
_TARGET_BLOCK_BYTES = 2 * 1024 * 1024   # ~2 MiB blocks: >=85% of HBM roofline


def _adjust_gamma_pallas(x: jax.Array, gamma: float, gain: float = 1.0) -> jax.Array:
    """Gamma-correct a float image tensor (any rank, NCHW typical) with Pallas."""
    # TODO(synk): integer images (torchvision adjust_gamma's x/255 rescale path)
    # are not handled; float images in [0, 1] are assumed, as in the original.
    gamma = float(gamma)
    gain = float(gain)
    orig_shape = x.shape
    orig_dtype = x.dtype
    n_elem = x.size
    if n_elem == 0:
        return x

    # Trace-time mode selection (random.choice only ever yields {0.5, 1, 2}).
    if gamma == 1.0:
        mode = "linear"
    elif gamma == 2.0:
        mode = "square"
    elif gamma == 0.5:
        mode = "sqrt"
    else:
        mode = "pow"
    use_gain = gain != 1.0
    kernel = _make_gamma_kernel(mode, use_gain)
    params = jnp.array([gamma, gain], dtype=jnp.float32)

    itemsize = x.dtype.itemsize

    # ---- layout selection: lane-dense 2-D slab (rows, lanes) ----------------
    # lanes is a power-of-two multiple of 128 (<= 512); grow it only while
    # rows stays a multiple of 8 so row-tiling remains legal under (8,128).
    lanes = 128
    if n_elem % 128 == 0:
        while (lanes < 512 and n_elem % (lanes * 2) == 0
               and (n_elem // (lanes * 2)) % 8 == 0):
            lanes *= 2
    rows = n_elem // lanes
    tileable = (n_elem % 128 == 0) and (rows % 8 == 0)
    small = n_elem * itemsize <= _SMALL_BYTES

    if not tileable and small:
        # Whole array as a single VMEM block in its original shape: no padding
        # copy, no extra HBM pass.  Fine for small images.
        return pl.pallas_call(
            kernel,
            out_shape=jax.ShapeDtypeStruct(orig_shape, orig_dtype),
            in_specs=[pl.BlockSpec(memory_space=pltpu.SMEM),
                      pl.BlockSpec(memory_space=pltpu.VMEM)],
            out_specs=pl.BlockSpec(memory_space=pltpu.VMEM),
        )(params, x)

    if not tileable:
        # Rare: large array whose element count isn't a multiple of 128 (or
        # whose rows aren't a multiple of 8).  Pad the flat tail to a multiple
        # of 8*128 so the tiled path applies.
        # TODO(synk): replace with a masked partial-tile path to avoid the copy.
        pad = (-n_elem) % (8 * 128)
        x_flat = jnp.pad(x.reshape(-1), (0, pad))
        lanes = 128
        rows = x_flat.size // lanes
    else:
        x_flat = x.reshape(-1)

    x2d = x_flat.reshape(rows, lanes)

    # ---- tile size: ~2 MiB blocks, >= 2 grid steps for v7x megacore ---------
    max_tile_rows = max(8, (_TARGET_BLOCK_BYTES // (lanes * itemsize)) // 8 * 8)
    if rows >= 16:
        cap = min(max_tile_rows, rows // 2)   # at least two grid steps
    else:
        cap = rows
    tile_rows = max(8, (cap // 8) * 8)
    grid = (pl.cdiv(rows, tile_rows),)        # partial last block handled by Pallas

    out2d = pl.pallas_call(
        kernel,
        out_shape=jax.ShapeDtypeStruct((rows, lanes), orig_dtype),
        grid=grid,
        in_specs=[
            pl.BlockSpec(memory_space=pltpu.SMEM),              # [gamma, gain]
            pl.BlockSpec((tile_rows, lanes), lambda i: (i, 0)),
        ],
        out_specs=pl.BlockSpec((tile_rows, lanes), lambda i: (i, 0)),
        compiler_params=pltpu.CompilerParams(
            dimension_semantics=("parallel",),
            vmem_limit_bytes=32 * 1024 * 1024,   # safe on v5e/v6e/v7x
        ),
    )(params, x2d)

    out_flat = out2d.reshape(-1)
    if out_flat.size != n_elem:
        out_flat = out_flat[:n_elem]
    return out_flat.reshape(orig_shape)


# --------------------------- Module equivalent ----------------------------

class RandomGammaCorrection:
    """JAX/Pallas port of mon.data.augment.transform.RandomGammaCorrection."""

    def __init__(self, gamma: float | Sequence[float] | None = None):
        self.gamma = gamma

    def __call__(self, x: jax.Array) -> jax.Array:
        if self.gamma is None:
            # Matches the PyTorch module: samples once and stores it.
            self.gamma = random.choice([0.5, 1, 2])
            return _adjust_gamma_pallas(x, self.gamma, gain=1.0)
        elif isinstance(self.gamma, tuple):
            gamma = random.uniform(*self.gamma)
            return _adjust_gamma_pallas(x, gamma, gain=1.0)
        elif self.gamma == 0:
            return x
        else:
            return _adjust_gamma_pallas(x, self.gamma, gain=1.0)


# --------------------------------- Main -----------------------------------

if __name__ == "__main__":
    random.seed(0)  # deterministic gamma choice
    key = jax.random.PRNGKey(0)
    k1, k2, k3 = jax.random.split(key, 3)

    # NCHW image batch in [0, 1], like a float image tensor in PyTorch.
    x = jax.random.uniform(k1, (2, 4, 16, 16), dtype=jnp.float32)

    # Case 1: gamma = None -> random choice among {0.5, 1, 2} (special-cased modes).
    mod_none = RandomGammaCorrection(gamma=None)
    y_none = jax.block_until_ready(mod_none(x))
    ref_none = jnp.clip(jnp.power(x, mod_none.gamma), 0.0, 1.0)
    assert jnp.allclose(y_none, ref_none, atol=1e-5), "gamma=None mismatch"

    # Case 2: fixed non-special gamma -> general exp/log path, tiled grid >= 2.
    x_big = jax.random.uniform(k2, (2, 3, 64, 128), dtype=jnp.float32)
    y_fixed = jax.block_until_ready(RandomGammaCorrection(gamma=2.2)(x_big))
    ref_fixed = jnp.clip(jnp.power(x_big, 2.2), 0.0, 1.0)
    assert jnp.allclose(y_fixed, ref_fixed, atol=1e-5), "fixed gamma mismatch"

    # Case 3: gamma == 0 -> identity (no kernel).
    y_zero = jax.block_until_ready(RandomGammaCorrection(gamma=0)(x))
    assert jnp.array_equal(y_zero, x), "gamma=0 should be identity"

    # Case 4: gamma == 2 special case (pure VPU square path).
    y_sq = jax.block_until_ready(RandomGammaCorrection(gamma=2)(x))
    assert jnp.allclose(y_sq, jnp.clip(x * x, 0.0, 1.0), atol=1e-6), "gamma=2 mismatch"

    # Case 5: element count not a multiple of 128 -> whole-array (no-pad) fallback.
    x_odd = jax.random.uniform(k3, (1, 3, 15, 17), dtype=jnp.float32)
    y_odd = jax.block_until_ready(RandomGammaCorrection(gamma=1.7)(x_odd))
    ref_odd = jnp.clip(jnp.power(x_odd, 1.7), 0.0, 1.0)
    assert jnp.allclose(y_odd, ref_odd, atol=1e-5), "odd-shape fallback mismatch"

    print("KERNEL_OK")
</pallas_src>

<mosaic_0001>
module attributes {stable_mosaic.version = 11 : i64} {
  func.func @kernel(%arg0: i32, %arg1: memref<2xf32, #tpu.memory_space<smem>>, %arg2: memref<8x256xf32, #tpu.memory_space<vmem>>, %arg3: memref<8x256xf32, #tpu.memory_space<vmem>>) attributes {dimension_semantics = [#tpu.dimension_semantics<parallel>], iteration_bounds = array<i64: 1>, scalar_prefetch = 0 : i64, scratch_operands = 0 : i64, tpu.core_type = #tpu.core_type<tc>, window_params = [{transform_indices = @transform_0, window_bounds = array<i64: 2>}, {transform_indices = @transform_1, window_bounds = array<i64: 8, 256>}, {transform_indices = @transform_2, window_bounds = array<i64: 8, 256>}]} {
    %c0 = arith.constant 0 : index
    %c0_0 = arith.constant 0 : index
    %0 = vector.load %arg2[%c0, %c0_0] : memref<8x256xf32, #tpu.memory_space<vmem>>, vector<8x256xf32>
    %cst = arith.constant 0.000000e+00 : f32
    %cst_1 = arith.constant 1.000000e+00 : f32
    %1 = vector.broadcast %cst : f32 to vector<8x256xf32>
    %2 = arith.maximumf %1, %0 : vector<8x256xf32>
    %3 = vector.broadcast %cst_1 : f32 to vector<8x256xf32>
    %4 = arith.minimumf %3, %2 : vector<8x256xf32>
    %c0_2 = arith.constant 0 : index
    %c0_3 = arith.constant 0 : index
    %5 = vector.load %arg3[%c0_2, %c0_3] : memref<8x256xf32, #tpu.memory_space<vmem>>, vector<8x256xf32>
    tpu.vector_store %arg3[%c0_2, %c0_3], %4 {strides = array<i32>} : memref<8x256xf32, #tpu.memory_space<vmem>>, vector<8x256xf32>,
    return
  }
  func.func @transform_0(%arg0: i32) -> i32 {
    %c0_i32 = arith.constant 0 : i32
    %c0_i32_0 = arith.constant 0 : i32
    return %c0_i32 : i32
  }
  func.func @transform_1(%arg0: i32) -> (i32, i32) {
    %c0_i32 = arith.constant 0 : i32
    %c0_i32_0 = arith.constant 0 : i32
    return %arg0, %c0_i32 : i32, i32
  }
  func.func @transform_2(%arg0: i32) -> (i32, i32) {
    %c0_i32 = arith.constant 0 : i32
    %c0_i32_0 = arith.constant 0 : i32
    return %arg0, %c0_i32 : i32, i32
  }
}

</mosaic_0001>

<llo_original>
// kernel: tpu_custom_call.1
$region0: #{tpu_custom_call.1}
  #allocation0 [shape = 'u32[]', space=smem, size = 0x4, offset = 0x4, fixed_abs, tag = 'smem constant byte address 0x4 - core index']
  #allocation1 [shape = 'u32[72,128]{1,0:T(1,128)}', space=vmem, size = 0x9000, scoped, tag = 'internal scratch']
  %s0 = inlined_call_operand.hbm [shape: f32[2], index: 0, kind: input, shape index: {}]
  %s1 = inlined_call_operand.hbm [shape: f32[8,256], index: 1, kind: input, shape index: {}]
  %s2 = inlined_call_operand.hbm [shape: f32[8,256], index: 2, kind: output, shape index: {}]
  %s3 = sld [smem:[#allocation0]]
  $region26: #{tpu_custom_call.1} parent=0
    _
  %s5 = ssub.s32 1, %s3
  %s6 = scalar_select 0, %s5, %s3
  $region1: #{tpu_custom_call.1} parent=0
    #allocation2 [shape = 'u8[512]{0}', space=smem, size = 0x200, scoped, tag = 'input window, operand 0, single buffered']
    #allocation3 [shape = 's32[1]{0}', space=sflag, size = 0x4, scoped, tag = 'scoped memory for tpu_custom_call.1']
    #allocation4 [shape = 's32[1]{0}', space=sflag, size = 0x4, scoped, tag = 'scoped memory for tpu_custom_call.1']
    #allocation5 [shape = 's32[1]{0}', space=sflag, size = 0x4, scoped, tag = 'scoped memory for tpu_custom_call.1']
    #allocation6 [shape = 'u8[8192]{0}', space=vmem, size = 0x2000, scoped, tag = 'input window, operand 1, single buffered']
    #allocation7 [shape = 'u8[8192]{0}', space=vmem, size = 0x2000, scoped, tag = 'output window, operand 0, single buffered']
    %7 = vsyncpa [#allocation5], 0
    %8 = vsyncpa [#allocation3], 0
    %9 = vsyncpa [#allocation4], 0
    // Predicated region
    $region2: #{tpu_custom_call.1} parent=1 // pred_check
      _
    $region3: #{tpu_custom_call.1} parent=1 // pred_check_branch
      %11 = sbr.rel (0) target = $region5
    $region4: #{tpu_custom_call.1} parent=1 // pred_region
      %13 = vsyncadd [#allocation5], 0
      %s15 = sshll.u32 %s0, 4
      %s16 = int_to_ptr.hbm [resolvable:$true] %s15
      %18 = dma.hbm_to_smem %s16, 16, [#allocation2], [#allocation5]
    $region5: #{tpu_custom_call.1} parent=1 // pred_fallthru
      _
    // Predicated region
    $region6: #{tpu_custom_call.1} parent=1 // pred_check
      _
    $region7: #{tpu_custom_call.1} parent=1 // pred_check_branch
      %20 = sbr.rel (0) target = $region9
    $region8: #{tpu_custom_call.1} parent=1 // pred_region
      %22 = vsyncadd [#allocation3], 0
      %s24 = sshll.u32 %s1, 4
      %s25 = int_to_ptr.hbm [resolvable:$true] %s24
      %s26 = sshll.u32 [#allocation6], 4
      %s27 = int_to_ptr.vmem [resolvable:$true] %s26
      %29 = dma.hbm_to_vmem [thread:$0]  %s25, 256, %s27, [#allocation3]
    $region9: #{tpu_custom_call.1} parent=1 // pred_fallthru
      _
    // Predicated region
    $region10: #{tpu_custom_call.1} parent=1 // pred_check
      _
    $region11: #{tpu_custom_call.1} parent=1 // pred_check_branch
      %31 = sbr.rel (0) target = $region13
    $region12: #{tpu_custom_call.1} parent=1 // pred_region
      %33 = dma.done [#allocation5], 16
    $region13: #{tpu_custom_call.1} parent=1 // pred_fallthru
      _
    // Predicated region
    $region14: #{tpu_custom_call.1} parent=1 // pred_check
      _
    $region15: #{tpu_custom_call.1} parent=1 // pred_check_branch
      %35 = sbr.rel (0) target = $region17
    $region16: #{tpu_custom_call.1} parent=1 // pred_region
      %37 = dma.done [#allocation3], 256
    $region17: #{tpu_custom_call.1} parent=1 // pred_fallthru
      _
    %38 = sfence
    %v39 = vld [vmem:[#allocation6] sm:$0xff]
    %v40 = vld [vmem:[#allocation6 + $0x8] sm:$0xff]
    %v41 = vmax.f32 %v39, 0.0
    %v42 = vmax.f32 %v40, 0.0
    %v43 = vmin.f32 %v41, 1.0
    %v44 = vmin.f32 %v42, 1.0
    %45 = vst [vmem:[#allocation7] sm:$0xff] %v43
    %46 = vst [vmem:[#allocation7 + $0x8] sm:$0xff] %v44
    // Predicated region
    $region18: #{tpu_custom_call.1} parent=1 // pred_check
      _
    $region19: #{tpu_custom_call.1} parent=1 // pred_check_branch
      %48 = sbr.rel (0) target = $region21
    $region20: #{tpu_custom_call.1} parent=1 // pred_region
      %50 = vsyncadd [#allocation4], 0
      %s52 = sshll.u32 [#allocation7], 4
      %s53 = int_to_ptr.vmem [resolvable:$true] %s52
      %s54 = sshll.u32 %s2, 4
      %s55 = int_to_ptr.hbm [resolvable:$true] %s54
      %57 = dma.vmem_to_hbm [thread:$0]  %s53, 256, %s55, [#allocation4]
    $region21: #{tpu_custom_call.1} parent=1 // pred_fallthru
      _
    // Predicated region
    $region22: #{tpu_custom_call.1} parent=1 // pred_check
      _
    $region23: #{tpu_custom_call.1} parent=1 // pred_check_branch
      %59 = sbr.rel (0) target = $region25
    $region24: #{tpu_custom_call.1} parent=1 // pred_region
      %61 = dma.done [#allocation4], 256
    $region25: #{tpu_custom_call.1} parent=1 // pred_fallthru
      _
    %62 = vsyncpa [#allocation3], 1
    %63 = vsyncpa [#allocation4], 1
    %64 = vsyncpa [#allocation5], 1

</llo_original>
